<compile_context>
chip_gen: v7x
topology: tpu7x:2x2x1
jax: 0.10.0
libtpu: 0.0.40
codegen_flags: <defaults>
</compile_context>

<pallas_src>
import numpy as np

import jax
import jax.numpy as jnp
from jax.experimental import pallas as pl
from jax.experimental.pallas import tpu as pltpu

LANE = 128                    # vreg lane width
MIN_TILE_ROWS = 512           # floor: ~256 KiB f32 tiles (>=85% of HBM roofline)
DEFAULT_MAX_TILE_ROWS = 4096  # ~2 MiB f32 tiles; double-buffered in+out = 8 MiB


def _round_up(a, m):
    return -(-a // m) * m


def _affine_kernel(w_ref, b_ref, x_ref, o_ref):
    # w_ref, b_ref: (1,) f32 scalars in SMEM (composed affine map of the chain)
    # x_ref, o_ref: (tile_rows, 128) lane-dense tiles in VMEM
    w = w_ref[0]
    b = b_ref[0]
    o_ref[...] = (x_ref[...].astype(jnp.float32) * w + b).astype(o_ref.dtype)


def _fold_affine(weights, biases):
    """Compose the chain of scalar affine layers into (W_total, B_total)."""
    num_b = int(weights.shape[0])
    if num_b == 0:
        return jnp.ones((1,), jnp.float32), jnp.zeros((1,), jnp.float32)
    wf = weights.astype(jnp.float32).reshape(num_b)
    bf = biases.astype(jnp.float32).reshape(num_b)
    suffix = jnp.cumprod(wf[::-1])[::-1]          # suffix[i] = prod_{j>=i} w_j
    w_tot = suffix[0]                             # prod of all weights
    suffix_excl = jnp.concatenate([suffix[1:], jnp.ones((1,), jnp.float32)])
    b_tot = jnp.dot(bf, suffix_excl)              # sum_i b_i * prod_{j>i} w_j
    return w_tot.reshape(1), b_tot.reshape(1)


def chain_linear(x, weights, biases, *, max_tile_rows=DEFAULT_MAX_TILE_ROWS):
    """Apply the chain of Linear(1,1) layers.

    x: any shape whose elements are the scalar features (e.g. (B, 1));
    weights/biases: (num_b,) vectors of W_i[0,0] and b_i[0].
    """
    orig_shape = x.shape
    orig_dtype = x.dtype
    itemsize = jnp.dtype(orig_dtype).itemsize
    sub = max(8, 32 // itemsize)          # 8 for f32, 16 for bf16, 32 for int8/fp8

    w_s, b_s = _fold_affine(weights, biases)

    # --- lane-dense layout: view as (rows, 128) -------------------------------
    n = int(np.prod(orig_shape)) if orig_shape else 1
    rows = max(sub, _round_up(-(-n // LANE), sub))

    floor_rows = min(_round_up(MIN_TILE_ROWS, sub), rows)
    tile_rows = min(int(max_tile_rows), rows)
    tile_rows = max(tile_rows, floor_rows)        # ignore pathological small caps
    tile_rows = _round_up(tile_rows, sub)
    # v7x: guarantee >=2 grid steps so both TensorCores stream (only when it
    # costs no padding; single-TC v5e/v6e unaffected).
    if rows <= tile_rows and rows >= 2 * floor_rows and rows % (2 * sub) == 0:
        tile_rows = rows // 2
    num_tiles = -(-rows // tile_rows)
    rows_pad = num_tiles * tile_rows
    n_pad = rows_pad * LANE

    if n_pad == n:                                 # aligned fast path: no copies
        x2d = x.reshape(rows_pad, LANE)
    else:
        x2d = jnp.pad(x.reshape(-1), (0, n_pad - n)).reshape(rows_pad, LANE)

    out2d = pl.pallas_call(
        _affine_kernel,
        out_shape=jax.ShapeDtypeStruct((rows_pad, LANE), orig_dtype),
        grid_spec=pltpu.PrefetchScalarGridSpec(
            num_scalar_prefetch=0,
            grid=(num_tiles,),
            in_specs=[
                pl.BlockSpec(memory_space=pltpu.MemorySpace.SMEM),   # W_total
                pl.BlockSpec(memory_space=pltpu.MemorySpace.SMEM),   # B_total
                pl.BlockSpec((tile_rows, LANE), lambda i: (i, 0)),   # x tile
            ],
            out_specs=pl.BlockSpec((tile_rows, LANE), lambda i: (i, 0)),
        ),
        compiler_params=pltpu.CompilerParams(
            dimension_semantics=("parallel",),      # shard across v7x's 2 TCs
            vmem_limit_bytes=32 * 1024 * 1024,      # safe on v5e/v6e/v7x
        ),
        cost_estimate=pl.CostEstimate(
            flops=2 * n_pad,
            transcendentals=0,
            bytes_accessed=2 * n_pad * itemsize,
        ),
    )(w_s, b_s, x2d)

    if n_pad == n:                                 # aligned fast path: no slice
        return out2d.reshape(orig_shape)
    return out2d.reshape(-1)[:n].reshape(orig_shape)


def init_params(key, num_b, allow_bias):
    """Deterministic init mirroring the PyTorch module:
    xavier_uniform_ on each (1,1) weight -> U(-sqrt(3), sqrt(3)); biases zeroed
    (weight_init_bias zeroes them; without bias the forward uses torch.zeros(1))."""
    bound = float(np.sqrt(6.0 / (1.0 + 1.0)))  # fan_in = fan_out = 1
    weights = jax.random.uniform(
        key, (num_b,), dtype=jnp.float32, minval=-bound, maxval=bound
    )
    biases = jnp.zeros((num_b,), dtype=jnp.float32)
    del allow_bias  # bias values are zero either way, matching the reference
    return weights, biases


def reference_forward(x, weights, biases):
    # Sequential per-layer fold, exactly mirroring the PyTorch forward.
    out = x.astype(jnp.float32)
    for i in range(weights.shape[0]):
        out = out * weights[i] + biases[i]
    return out.astype(x.dtype)


if __name__ == "__main__":
    key = jax.random.PRNGKey(0)
    k_w, k_x, k_b, k_x2, k_x3 = jax.random.split(key, 5)

    num_b = 3
    allow_bias = True
    batch = 8

    # Case 1: module's own init (zero biases), tiny batch, single-tile grid.
    weights, biases = init_params(k_w, num_b, allow_bias)
    x = jax.random.normal(k_x, (batch, 1), dtype=jnp.float32)
    out = jax.block_until_ready(chain_linear(x, weights, biases))
    expected = reference_forward(x, weights, biases)
    np.testing.assert_allclose(
        np.asarray(out), np.asarray(expected), rtol=1e-5, atol=1e-6
    )

    # Case 2: nonzero biases, unaligned batch (exercises the pad + tail-slice
    # path), and a tiny user max_tile_rows that the floor must override.
    biases2 = jax.random.normal(k_b, (num_b,), dtype=jnp.float32)
    x2 = jax.random.normal(k_x2, (2050, 1), dtype=jnp.float32)
    out2 = jax.block_until_ready(
        chain_linear(x2, weights, biases2, max_tile_rows=8)
    )
    expected2 = reference_forward(x2, weights, biases2)
    np.testing.assert_allclose(
        np.asarray(out2), np.asarray(expected2), rtol=1e-5, atol=1e-6
    )

    # Case 3: aligned batch (exercises the no-pad / no-slice fast path and the
    # >=2-tile split for dual-TensorCore streaming).
    x3 = jax.random.normal(k_x3, (1024 * 128, 1), dtype=jnp.float32)
    out3 = jax.block_until_ready(chain_linear(x3, weights, biases2))
    expected3 = reference_forward(x3, weights, biases2)
    np.testing.assert_allclose(
        np.asarray(out3), np.asarray(expected3), rtol=1e-5, atol=1e-6
    )

    print("KERNEL_OK")
</pallas_src>

<mosaic_0001>
module attributes {stable_mosaic.version = 11 : i64} {
  func.func @_affine_kernel(%arg0: i32, %arg1: memref<1xf32, #tpu.memory_space<smem>>, %arg2: memref<1xf32, #tpu.memory_space<smem>>, %arg3: memref<8x128xf32, #tpu.memory_space<vmem>>, %arg4: memref<8x128xf32, #tpu.memory_space<vmem>>) attributes {dimension_semantics = [#tpu.dimension_semantics<parallel>], iteration_bounds = array<i64: 1>, scalar_prefetch = 0 : i64, scratch_operands = 0 : i64, tpu.core_type = #tpu.core_type<tc>, window_params = [{transform_indices = @transform_0, window_bounds = array<i64: 1>}, {transform_indices = @transform_1, window_bounds = array<i64: 1>}, {transform_indices = @transform_2, window_bounds = array<i64: 8, 128>}, {transform_indices = @transform_3, window_bounds = array<i64: 8, 128>}]} {
    %c0 = arith.constant 0 : index
    %0 = memref.load %arg1[%c0] : memref<1xf32, #tpu.memory_space<smem>>
    %c0_0 = arith.constant 0 : index
    %1 = memref.load %arg2[%c0_0] : memref<1xf32, #tpu.memory_space<smem>>
    %c0_1 = arith.constant 0 : index
    %c0_2 = arith.constant 0 : index
    %2 = vector.load %arg3[%c0_1, %c0_2] : memref<8x128xf32, #tpu.memory_space<vmem>>, vector<8x128xf32>
    %3 = vector.broadcast %0 : f32 to vector<8x128xf32>
    %4 = arith.mulf %2, %3 : vector<8x128xf32>
    %5 = vector.broadcast %1 : f32 to vector<8x128xf32>
    %6 = arith.addf %4, %5 : vector<8x128xf32>
    %c0_3 = arith.constant 0 : index
    %c0_4 = arith.constant 0 : index
    %7 = vector.load %arg4[%c0_3, %c0_4] : memref<8x128xf32, #tpu.memory_space<vmem>>, vector<8x128xf32>
    tpu.vector_store %arg4[%c0_3, %c0_4], %6 {strides = array<i32>} : memref<8x128xf32, #tpu.memory_space<vmem>>, vector<8x128xf32>,
    return
  }
  func.func @transform_0(%arg0: i32) -> i32 {
    %c0_i32 = arith.constant 0 : i32
    %c0_i32_0 = arith.constant 0 : i32
    return %c0_i32 : i32
  }
  func.func @transform_1(%arg0: i32) -> i32 {
    %c0_i32 = arith.constant 0 : i32
    %c0_i32_0 = arith.constant 0 : i32
    return %c0_i32 : i32
  }
  func.func @transform_2(%arg0: i32) -> (i32, i32) {
    %c0_i32 = arith.constant 0 : i32
    %c0_i32_0 = arith.constant 0 : i32
    return %arg0, %c0_i32 : i32, i32
  }
  func.func @transform_3(%arg0: i32) -> (i32, i32) {
    %c0_i32 = arith.constant 0 : i32
    %c0_i32_0 = arith.constant 0 : i32
    return %arg0, %c0_i32 : i32, i32
  }
}

</mosaic_0001>

<llo_original>
// kernel: tpu_custom_call.1
$region0: #{tpu_custom_call.1}
  #allocation0 [shape = 'u32[]', space=smem, size = 0x4, offset = 0x4, fixed_abs, tag = 'smem constant byte address 0x4 - core index']
  #allocation1 [shape = 'u32[144,128]{1,0:T(1,128)}', space=vmem, size = 0x12000, scoped, tag = 'internal scratch']
  #allocation2 [shape = 'f32[1]{0:T(128)S(6)}', space=smem, size = 0x200, scoped, tag = 'scoped memory for tpu_custom_call.1']
  #allocation3 [shape = 'f32[1]{0:T(128)S(6)}', space=smem, size = 0x200, scoped, tag = 'scoped memory for tpu_custom_call.1']
  %s0 = inlined_call_operand.<no memory space> [shape: f32[1], index: 0, kind: input, shape index: {}]
  %s1 = inlined_call_operand.<no memory space> [shape: f32[1], index: 1, kind: input, shape index: {}]
  %s2 = inlined_call_operand.hbm [shape: f32[8,128], index: 2, kind: input, shape index: {}]
  %s3 = inlined_call_operand.hbm [shape: f32[8,128], index: 3, kind: output, shape index: {}]
  %s4 = sld [smem:[#allocation0]]
  $region26: #{tpu_custom_call.1} parent=0
    _
  %s6 = ssub.s32 1, %s4
  %s7 = scalar_select 0, %s6, %s4
  %8 = sst [smem:[#allocation2]] %s0
  %9 = sst [smem:[#allocation3]] %s1
  $region1: #{tpu_custom_call.1} parent=0
    #allocation4 [shape = 'u8[4096]{0}', space=vmem, size = 0x1000, scoped, tag = 'input window, operand 2, single buffered']
    #allocation5 [shape = 's32[1]{0}', space=sflag, size = 0x4, scoped, tag = 'scoped memory for tpu_custom_call.1']
    #allocation6 [shape = 's32[1]{0}', space=sflag, size = 0x4, scoped, tag = 'scoped memory for tpu_custom_call.1']
    #allocation7 [shape = 'u8[4096]{0}', space=vmem, size = 0x1000, scoped, tag = 'output window, operand 0, single buffered']
    %10 = vsyncpa [#allocation5], 0
    %11 = vsyncpa [#allocation6], 0
    // Predicated region
    $region2: #{tpu_custom_call.1} parent=1 // pred_check
      _
    $region3: #{tpu_custom_call.1} parent=1 // pred_check_branch
      %13 = sbr.rel (0) target = $region5
    $region4: #{tpu_custom_call.1} parent=1 // pred_region
      _
    $region5: #{tpu_custom_call.1} parent=1 // pred_fallthru
      _
    // Predicated region
    $region6: #{tpu_custom_call.1} parent=1 // pred_check
      _
    $region7: #{tpu_custom_call.1} parent=1 // pred_check_branch
      %15 = sbr.rel (0) target = $region9
    $region8: #{tpu_custom_call.1} parent=1 // pred_region
      _
    $region9: #{tpu_custom_call.1} parent=1 // pred_fallthru
      _
    // Predicated region
    $region10: #{tpu_custom_call.1} parent=1 // pred_check
      _
    $region11: #{tpu_custom_call.1} parent=1 // pred_check_branch
      %17 = sbr.rel (0) target = $region13
    $region12: #{tpu_custom_call.1} parent=1 // pred_region
      %s19 = ssub.s32 128, 128
      %20 = vsyncadd [#allocation5], %s19
      %s22 = sshll.u32 [#allocation4], 4
      %s23 = int_to_ptr.vmem [resolvable:$true] %s22
      %25 = dma.hbm_to_vmem [thread:$0]  %s2, 128, %s23, [#allocation5]
    $region13: #{tpu_custom_call.1} parent=1 // pred_fallthru
      _
    // Predicated region
    $region14: #{tpu_custom_call.1} parent=1 // pred_check
      _
    $region15: #{tpu_custom_call.1} parent=1 // pred_check_branch
      %27 = sbr.rel (0) target = $region17
    $region16: #{tpu_custom_call.1} parent=1 // pred_region
      %28 = dma.done [#allocation5], 128
    $region17: #{tpu_custom_call.1} parent=1 // pred_fallthru
      _
    %s29 = sld [smem:[#allocation2]]
    %s30 = sld [smem:[#allocation3]]
    %v31 = vld [vmem:[#allocation4] sm:$0xff]
    %v32 = vstv %s29
    %v33 = vmul.f32 %v31, %v32
    %v34 = vstv %s30
    %v35 = vadd.f32 %v33, %v34
    %36 = vst [vmem:[#allocation7] sm:$0xff] %v35
    // Predicated region
    $region18: #{tpu_custom_call.1} parent=1 // pred_check
      _
    $region19: #{tpu_custom_call.1} parent=1 // pred_check_branch
      %38 = sbr.rel (0) target = $region21
    $region20: #{tpu_custom_call.1} parent=1 // pred_region
      %s40 = ssub.s32 128, 128
      %41 = vsyncadd [#allocation6], %s40
      %s43 = sshll.u32 [#allocation7], 4
      %s44 = int_to_ptr.vmem [resolvable:$true] %s43
      %46 = dma.vmem_to_hbm [thread:$0]  %s44, 128, %s3, [#allocation6]
    $region21: #{tpu_custom_call.1} parent=1 // pred_fallthru
      _
    // Predicated region
    $region22: #{tpu_custom_call.1} parent=1 // pred_check
      _
    $region23: #{tpu_custom_call.1} parent=1 // pred_check_branch
      %48 = sbr.rel (0) target = $region25
    $region24: #{tpu_custom_call.1} parent=1 // pred_region
      %49 = dma.done [#allocation6], 128
    $region25: #{tpu_custom_call.1} parent=1 // pred_fallthru
      _
    %50 = vsyncpa [#allocation5], 1
    %51 = vsyncpa [#allocation6], 1

</llo_original>
